<compile_context>
chip_gen: v6e
topology: v6e:2x2x1
jax: 0.10.0
libtpu: 0.0.40
codegen_flags: <defaults>
</compile_context>

<pallas_src>
import functools
import math

import jax
import jax.numpy as jnp
from jax.experimental import pallas as pl
from jax.experimental.pallas import tpu as pltpu


LAYER_DIMS = [(10, 256), (256, 256), (256, 128), (128, 128), (128, 2)]
IN_PAD = 16     # pad input features 10 -> 16 (zero rows added to W1 -> exact no-op)
OUT_PAD = 8     # pad output features 2 -> 8  (zero cols in W5/b5 -> exact no-op)
SUB = 16        # bf16 sublane packing granularity; tiles rounded to this


# ---------------------------------------------------------------------------
# Pallas kernel: full MLP forward for one batch tile
# ---------------------------------------------------------------------------
def mlp_kernel(x_ref,
               w1_ref, b1_ref,
               w2_ref, b2_ref,
               w3_ref, b3_ref,
               w4_ref, b4_ref,
               w5_ref, b5_ref,
               out_ref, *, act_dtype):
    def hidden_layer(h_bf16, w_ref, b_ref):
        # MXU: bf16 x bf16 -> f32 accumulate.
        acc = jnp.dot(h_bf16, w_ref[...], preferred_element_type=jnp.float32)
        # Epilogue (bias + ReLU) in act_dtype (bf16 on v6e/v7x, f32 on v5e).
        acc = acc.astype(act_dtype) + b_ref[...]
        return jnp.maximum(acc, 0).astype(jnp.bfloat16)

    h = x_ref[...]                                   # already bf16 from the wrapper
    h = hidden_layer(h, w1_ref, b1_ref)
    h = hidden_layer(h, w2_ref, b2_ref)
    h = hidden_layer(h, w3_ref, b3_ref)
    h = hidden_layer(h, w4_ref, b4_ref)

    # Final layer: keep f32 all the way to the (tile, 8) f32 store.
    out = jnp.dot(h, w5_ref[...], preferred_element_type=jnp.float32) + b5_ref[...]
    out_ref[...] = out.astype(out_ref.dtype)


# ---------------------------------------------------------------------------
# Helpers
# ---------------------------------------------------------------------------
def _round_up(n, m):
    return (n + m - 1) // m * m


def _use_bf16_epilogue():
    """bf16 VALU exists on v6e/v7x; fall back to f32 epilogue on older chips."""
    try:
        kind = jax.devices()[0].device_kind.lower()
    except Exception:
        return True
    for old in ("v2", "v3", "v4", "v5"):
        if old in kind:
            return False
    return True


def prepare_params(params, hidden_bias_dtype):
    """Pad W1 rows 10->16 and W5/b5 cols 2->8; weights -> bf16.
    Hidden biases stored in `hidden_bias_dtype`, final bias stays f32."""
    prepared = []
    n = len(params)
    for li, (w, b) in enumerate(params):
        w = jnp.asarray(w, jnp.float32)
        b = jnp.asarray(b, jnp.float32).reshape(1, -1)
        if li == 0:
            w = jnp.pad(w, ((0, IN_PAD - w.shape[0]), (0, 0)))
        if li == n - 1:
            w = jnp.pad(w, ((0, 0), (0, OUT_PAD - w.shape[1])))
            b = jnp.pad(b, ((0, 0), (0, OUT_PAD - b.shape[1])))  # stays f32
        else:
            b = b.astype(hidden_bias_dtype)
        prepared.append((w.astype(jnp.bfloat16), b))
    return prepared


# ---------------------------------------------------------------------------
# Wrapper
# ---------------------------------------------------------------------------
def surrogate_model_forward(x, params, *, batch_tile=1024):
    """x: (B, 10) float32.  params: list of (W_in_out, b_1_out) tuples (f32)."""
    B, in_dim = x.shape
    assert in_dim == LAYER_DIMS[0][0]
    out_dim = LAYER_DIMS[-1][1]

    bf16_epi = _use_bf16_epilogue()
    act_dtype = jnp.bfloat16 if bf16_epi else jnp.float32
    prepared = prepare_params(params, hidden_bias_dtype=act_dtype)

    # Tile selection: big tiles to amortize per-step overhead, but cap so that large
    # batches still yield >= 2 tiles (v7x megacore), rounded to bf16 sublane packing.
    tile_cap = _round_up(pl.cdiv(_round_up(B, SUB), 2), SUB)
    tile = _round_up(max(SUB, min(batch_tile, tile_cap)), SUB)
    B_pad = _round_up(B, tile)
    grid = (B_pad // tile,)

    # Pad batch rows and input features with zeros directly in bf16 (zero rows of the
    # padded W1 make the feature padding numerically exact).
    x_pad = jnp.pad(x.astype(jnp.bfloat16),
                    ((0, B_pad - B), (0, IN_PAD - in_dim)))

    flat_params = []
    for w, b in prepared:
        flat_params.append(w)
        flat_params.append(b)

    # x tiled along batch; weights/biases broadcast (same full block every step).
    in_specs = [pl.BlockSpec((tile, IN_PAD), lambda i: (i, 0))]
    for w, b in prepared:
        in_specs.append(pl.BlockSpec(w.shape, lambda i: (0, 0)))
        in_specs.append(pl.BlockSpec(b.shape, lambda i: (0, 0)))

    out_specs = pl.BlockSpec((tile, OUT_PAD), lambda i: (i, 0))

    kernel = functools.partial(mlp_kernel, act_dtype=act_dtype)

    out_padded = pl.pallas_call(
        kernel,
        out_shape=jax.ShapeDtypeStruct((B_pad, OUT_PAD), jnp.float32),
        grid=grid,
        in_specs=in_specs,
        out_specs=out_specs,
        compiler_params=pltpu.CompilerParams(
            dimension_semantics=("parallel",),
            vmem_limit_bytes=32 * 1024 * 1024),
    )(x_pad, *flat_params)

    # Slice off batch padding and the 6 zero output lanes.
    return out_padded[:B, :out_dim]


# ---------------------------------------------------------------------------
# Deterministic parameter init (mimics nn.Linear default: U(-1/sqrt(fan_in), +))
# ---------------------------------------------------------------------------
def init_params(key):
    params = []
    for (fan_in, fan_out) in LAYER_DIMS:
        key, kw, kb = jax.random.split(key, 3)
        bound = 1.0 / math.sqrt(fan_in)
        w = jax.random.uniform(kw, (fan_in, fan_out), jnp.float32, -bound, bound)
        b = jax.random.uniform(kb, (1, fan_out), jnp.float32, -bound, bound)
        params.append((w, b))
    return params


def reference_forward(x, params):
    # f32 reference using bf16-rounded weights (same weight dtype as the kernel);
    # remaining diff comes only from bf16 activation/bias rounding inside the kernel.
    h = x.astype(jnp.float32)
    for i, (w, b) in enumerate(params):
        w32 = w.astype(jnp.bfloat16).astype(jnp.float32)
        h = h @ w32 + b
        if i < len(params) - 1:
            h = jnp.maximum(h, 0.0)
    return h


if __name__ == "__main__":
    key = jax.random.PRNGKey(0)
    key, kx = jax.random.split(key)

    B = 8
    x = jax.random.normal(kx, (B, 10), dtype=jnp.float32)
    params = init_params(key)

    out = surrogate_model_forward(x, params)
    out = jax.block_until_ready(out)

    ref = reference_forward(x, params)
    assert out.shape == (B, 2)
    assert jnp.allclose(out, ref, atol=2e-2, rtol=2e-2), "mismatch vs reference"

    print("KERNEL_OK")
</pallas_src>

<mosaic_0001>
module attributes {stable_mosaic.version = 11 : i64} {
  func.func @mlp_kernel(%arg0: i32, %arg1: memref<16x16xbf16, #tpu.memory_space<vmem>>, %arg2: memref<16x256xbf16, #tpu.memory_space<vmem>>, %arg3: memref<1x256xbf16, #tpu.memory_space<vmem>>, %arg4: memref<256x256xbf16, #tpu.memory_space<vmem>>, %arg5: memref<1x256xbf16, #tpu.memory_space<vmem>>, %arg6: memref<256x128xbf16, #tpu.memory_space<vmem>>, %arg7: memref<1x128xbf16, #tpu.memory_space<vmem>>, %arg8: memref<128x128xbf16, #tpu.memory_space<vmem>>, %arg9: memref<1x128xbf16, #tpu.memory_space<vmem>>, %arg10: memref<128x8xbf16, #tpu.memory_space<vmem>>, %arg11: memref<1x8xf32, #tpu.memory_space<vmem>>, %arg12: memref<16x8xf32, #tpu.memory_space<vmem>>) attributes {dimension_semantics = [#tpu.dimension_semantics<parallel>], iteration_bounds = array<i64: 1>, scalar_prefetch = 0 : i64, scratch_operands = 0 : i64, tpu.core_type = #tpu.core_type<tc>, window_params = [{transform_indices = @transform_0, window_bounds = array<i64: 16, 16>}, {pipeline_mode = #tpu.pipeline_mode<synchronous>, transform_indices = @transform_1, window_bounds = array<i64: 16, 256>}, {pipeline_mode = #tpu.pipeline_mode<synchronous>, transform_indices = @transform_2, window_bounds = array<i64: 1, 256>}, {pipeline_mode = #tpu.pipeline_mode<synchronous>, transform_indices = @transform_3, window_bounds = array<i64: 256, 256>}, {pipeline_mode = #tpu.pipeline_mode<synchronous>, transform_indices = @transform_4, window_bounds = array<i64: 1, 256>}, {pipeline_mode = #tpu.pipeline_mode<synchronous>, transform_indices = @transform_5, window_bounds = array<i64: 256, 128>}, {pipeline_mode = #tpu.pipeline_mode<synchronous>, transform_indices = @transform_6, window_bounds = array<i64: 1, 128>}, {pipeline_mode = #tpu.pipeline_mode<synchronous>, transform_indices = @transform_7, window_bounds = array<i64: 128, 128>}, {pipeline_mode = #tpu.pipeline_mode<synchronous>, transform_indices = @transform_8, window_bounds = array<i64: 1, 128>}, {pipeline_mode = #tpu.pipeline_mode<synchronous>, transform_indices = @transform_9, window_bounds = array<i64: 128, 8>}, {pipeline_mode = #tpu.pipeline_mode<synchronous>, transform_indices = @transform_10, window_bounds = array<i64: 1, 8>}, {transform_indices = @transform_11, window_bounds = array<i64: 16, 8>}]} {
    %c0 = arith.constant 0 : index
    %c0_0 = arith.constant 0 : index
    %0 = vector.load %arg1[%c0, %c0_0] : memref<16x16xbf16, #tpu.memory_space<vmem>>, vector<16x16xbf16>
    %c0_1 = arith.constant 0 : index
    %c0_2 = arith.constant 0 : index
    %1 = vector.load %arg2[%c0_1, %c0_2] : memref<16x256xbf16, #tpu.memory_space<vmem>>, vector<16x256xbf16>
    %cst = arith.constant dense<0.000000e+00> : vector<16x256xf32>
    %2 = tpu.matmul %0, %1, %cst {dimension_numbers = #tpu.dot_dimension_numbers<[1], [0], [0], [1], [0, 0, 1, 1], [], []>} : vector<16x16xbf16>, vector<16x256xbf16>, vector<16x256xf32> -> vector<16x256xf32>
    %3 = arith.truncf %2 : vector<16x256xf32> to vector<16x256xbf16>
    %c0_3 = arith.constant 0 : index
    %c0_4 = arith.constant 0 : index
    %4 = vector.load %arg3[%c0_3, %c0_4] : memref<1x256xbf16, #tpu.memory_space<vmem>>, vector<1x256xbf16>
    %5 = vector.broadcast %4 : vector<1x256xbf16> to vector<16x256xbf16>
    %6 = arith.addf %3, %5 : vector<16x256xbf16>
    %cst_5 = arith.constant 0.000000e+00 : bf16
    %7 = vector.broadcast %cst_5 : bf16 to vector<16x256xbf16>
    %8 = arith.maximumf %6, %7 : vector<16x256xbf16>
    %c0_6 = arith.constant 0 : index
    %c0_7 = arith.constant 0 : index
    %9 = vector.load %arg4[%c0_6, %c0_7] : memref<256x256xbf16, #tpu.memory_space<vmem>>, vector<256x256xbf16>
    %cst_8 = arith.constant dense<0.000000e+00> : vector<16x256xf32>
    %10 = tpu.matmul %8, %9, %cst_8 {dimension_numbers = #tpu.dot_dimension_numbers<[1], [0], [0], [1], [0, 0, 1, 1], [], []>} : vector<16x256xbf16>, vector<256x256xbf16>, vector<16x256xf32> -> vector<16x256xf32>
    %11 = arith.truncf %10 : vector<16x256xf32> to vector<16x256xbf16>
    %c0_9 = arith.constant 0 : index
    %c0_10 = arith.constant 0 : index
    %12 = vector.load %arg5[%c0_9, %c0_10] : memref<1x256xbf16, #tpu.memory_space<vmem>>, vector<1x256xbf16>
    %13 = vector.broadcast %12 : vector<1x256xbf16> to vector<16x256xbf16>
    %14 = arith.addf %11, %13 : vector<16x256xbf16>
    %cst_11 = arith.constant 0.000000e+00 : bf16
    %15 = vector.broadcast %cst_11 : bf16 to vector<16x256xbf16>
    %16 = arith.maximumf %14, %15 : vector<16x256xbf16>
    %c0_12 = arith.constant 0 : index
    %c0_13 = arith.constant 0 : index
    %17 = vector.load %arg6[%c0_12, %c0_13] : memref<256x128xbf16, #tpu.memory_space<vmem>>, vector<256x128xbf16>
    %cst_14 = arith.constant dense<0.000000e+00> : vector<16x128xf32>
    %18 = tpu.matmul %16, %17, %cst_14 {dimension_numbers = #tpu.dot_dimension_numbers<[1], [0], [0], [1], [0, 0, 1, 1], [], []>} : vector<16x256xbf16>, vector<256x128xbf16>, vector<16x128xf32> -> vector<16x128xf32>
    %19 = arith.truncf %18 : vector<16x128xf32> to vector<16x128xbf16>
    %c0_15 = arith.constant 0 : index
    %c0_16 = arith.constant 0 : index
    %20 = vector.load %arg7[%c0_15, %c0_16] : memref<1x128xbf16, #tpu.memory_space<vmem>>, vector<1x128xbf16>
    %21 = vector.broadcast %20 : vector<1x128xbf16> to vector<16x128xbf16>
    %22 = arith.addf %19, %21 : vector<16x128xbf16>
    %cst_17 = arith.constant 0.000000e+00 : bf16
    %23 = vector.broadcast %cst_17 : bf16 to vector<16x128xbf16>
    %24 = arith.maximumf %22, %23 : vector<16x128xbf16>
    %c0_18 = arith.constant 0 : index
    %c0_19 = arith.constant 0 : index
    %25 = vector.load %arg8[%c0_18, %c0_19] : memref<128x128xbf16, #tpu.memory_space<vmem>>, vector<128x128xbf16>
    %cst_20 = arith.constant dense<0.000000e+00> : vector<16x128xf32>
    %26 = tpu.matmul %24, %25, %cst_20 {dimension_numbers = #tpu.dot_dimension_numbers<[1], [0], [0], [1], [0, 0, 1, 1], [], []>} : vector<16x128xbf16>, vector<128x128xbf16>, vector<16x128xf32> -> vector<16x128xf32>
    %27 = arith.truncf %26 : vector<16x128xf32> to vector<16x128xbf16>
    %c0_21 = arith.constant 0 : index
    %c0_22 = arith.constant 0 : index
    %28 = vector.load %arg9[%c0_21, %c0_22] : memref<1x128xbf16, #tpu.memory_space<vmem>>, vector<1x128xbf16>
    %29 = vector.broadcast %28 : vector<1x128xbf16> to vector<16x128xbf16>
    %30 = arith.addf %27, %29 : vector<16x128xbf16>
    %cst_23 = arith.constant 0.000000e+00 : bf16
    %31 = vector.broadcast %cst_23 : bf16 to vector<16x128xbf16>
    %32 = arith.maximumf %30, %31 : vector<16x128xbf16>
    %c0_24 = arith.constant 0 : index
    %c0_25 = arith.constant 0 : index
    %33 = vector.load %arg10[%c0_24, %c0_25] : memref<128x8xbf16, #tpu.memory_space<vmem>>, vector<128x8xbf16>
    %cst_26 = arith.constant dense<0.000000e+00> : vector<16x8xf32>
    %34 = tpu.matmul %32, %33, %cst_26 {dimension_numbers = #tpu.dot_dimension_numbers<[1], [0], [0], [1], [0, 0, 1, 1], [], []>} : vector<16x128xbf16>, vector<128x8xbf16>, vector<16x8xf32> -> vector<16x8xf32>
    %c0_27 = arith.constant 0 : index
    %c0_28 = arith.constant 0 : index
    %35 = vector.load %arg11[%c0_27, %c0_28] : memref<1x8xf32, #tpu.memory_space<vmem>>, vector<1x8xf32>
    %36 = vector.broadcast %35 : vector<1x8xf32> to vector<16x8xf32>
    %37 = arith.addf %34, %36 : vector<16x8xf32>
    %c0_29 = arith.constant 0 : index
    %c0_30 = arith.constant 0 : index
    %38 = vector.load %arg12[%c0_29, %c0_30] : memref<16x8xf32, #tpu.memory_space<vmem>>, vector<16x8xf32>
    tpu.vector_store %arg12[%c0_29, %c0_30], %37 {strides = array<i32>} : memref<16x8xf32, #tpu.memory_space<vmem>>, vector<16x8xf32>,
    return
  }
  func.func @transform_0(%arg0: i32) -> (i32, i32) {
    %c0_i32 = arith.constant 0 : i32
    %c0_i32_0 = arith.constant 0 : i32
    return %arg0, %c0_i32 : i32, i32
  }
  func.func @transform_1(%arg0: i32) -> (i32, i32) {
    %c0_i32 = arith.constant 0 : i32
    %c0_i32_0 = arith.constant 0 : i32
    %c0_i32_1 = arith.constant 0 : i32
    return %c0_i32, %c0_i32_0 : i32, i32
  }
  func.func @transform_2(%arg0: i32) -> (i32, i32) {
    %c0_i32 = arith.constant 0 : i32
    %c0_i32_0 = arith.constant 0 : i32
    %c0_i32_1 = arith.constant 0 : i32
    return %c0_i32, %c0_i32_0 : i32, i32
  }
  func.func @transform_3(%arg0: i32) -> (i32, i32) {
    %c0_i32 = arith.constant 0 : i32
    %c0_i32_0 = arith.constant 0 : i32
    %c0_i32_1 = arith.constant 0 : i32
    return %c0_i32, %c0_i32_0 : i32, i32
  }
  func.func @transform_4(%arg0: i32) -> (i32, i32) {
    %c0_i32 = arith.constant 0 : i32
    %c0_i32_0 = arith.constant 0 : i32
    %c0_i32_1 = arith.constant 0 : i32
    return %c0_i32, %c0_i32_0 : i32, i32
  }
  func.func @transform_5(%arg0: i32) -> (i32, i32) {
    %c0_i32 = arith.constant 0 : i32
    %c0_i32_0 = arith.constant 0 : i32
    %c0_i32_1 = arith.constant 0 : i32
    return %c0_i32, %c0_i32_0 : i32, i32
  }
  func.func @transform_6(%arg0: i32) -> (i32, i32) {
    %c0_i32 = arith.constant 0 : i32
    %c0_i32_0 = arith.constant 0 : i32
    %c0_i32_1 = arith.constant 0 : i32
    return %c0_i32, %c0_i32_0 : i32, i32
  }
  func.func @transform_7(%arg0: i32) -> (i32, i32) {
    %c0_i32 = arith.constant 0 : i32
    %c0_i32_0 = arith.constant 0 : i32
    %c0_i32_1 = arith.constant 0 : i32
    return %c0_i32, %c0_i32_0 : i32, i32
  }
  func.func @transform_8(%arg0: i32) -> (i32, i32) {
    %c0_i32 = arith.constant 0 : i32
    %c0_i32_0 = arith.constant 0 : i32
    %c0_i32_1 = arith.constant 0 : i32
    return %c0_i32, %c0_i32_0 : i32, i32
  }
  func.func @transform_9(%arg0: i32) -> (i32, i32) {
    %c0_i32 = arith.constant 0 : i32
    %c0_i32_0 = arith.constant 0 : i32
    %c0_i32_1 = arith.constant 0 : i32
    return %c0_i32, %c0_i32_0 : i32, i32
  }
  func.func @transform_10(%arg0: i32) -> (i32, i32) {
    %c0_i32 = arith.constant 0 : i32
    %c0_i32_0 = arith.constant 0 : i32
    %c0_i32_1 = arith.constant 0 : i32
    return %c0_i32, %c0_i32_0 : i32, i32
  }
  func.func @transform_11(%arg0: i32) -> (i32, i32) {
    %c0_i32 = arith.constant 0 : i32
    %c0_i32_0 = arith.constant 0 : i32
    return %arg0, %c0_i32 : i32, i32
  }
}

</mosaic_0001>

<llo_original>
// kernel: tpu_custom_call.1
$region0: #{tpu_custom_call.1}
  #allocation0 [shape = 'u32[]', space=smem, size = 0x4, offset = 0x4, fixed_abs, tag = 'smem constant byte address 0x4 - core index']
  #allocation1 [shape = 'u32[144,128]{1,0:T(1,128)}', space=vmem, size = 0x12000, scoped, tag = 'internal scratch']
  %s0 = inlined_call_operand.hbm [shape: bf16[16,16], index: 0, kind: input, shape index: {}]
  %s1 = inlined_call_operand.vmem [shape: bf16[16,256], index: 1, kind: input, shape index: {}]
  %s2 = inlined_call_operand.hbm [shape: bf16[1,256], index: 2, kind: input, shape index: {}]
  %s3 = inlined_call_operand.hbm [shape: bf16[256,256], index: 3, kind: input, shape index: {}]
  %s4 = inlined_call_operand.hbm [shape: bf16[1,256], index: 4, kind: input, shape index: {}]
  %s5 = inlined_call_operand.hbm [shape: bf16[256,128], index: 5, kind: input, shape index: {}]
  %s6 = inlined_call_operand.hbm [shape: bf16[1,128], index: 6, kind: input, shape index: {}]
  %s7 = inlined_call_operand.vmem [shape: bf16[128,128], index: 7, kind: input, shape index: {}]
  %s8 = inlined_call_operand.hbm [shape: bf16[1,128], index: 8, kind: input, shape index: {}]
  %s9 = inlined_call_operand.vmem [shape: bf16[128,8], index: 9, kind: input, shape index: {}]
  %s10 = inlined_call_operand.vmem [shape: f32[1,8], index: 10, kind: input, shape index: {}]
  %s11 = inlined_call_operand.vmem [shape: f32[16,8], index: 11, kind: output, shape index: {}]
  %s12 = sld [smem:[#allocation0]]
  $region82: #{tpu_custom_call.1} parent=0
    _
  %s14 = ssub.s32 1, %s12
  %s15 = scalar_select 0, %s14, %s12
  $region1: #{tpu_custom_call.1} parent=0
    #allocation2 [shape = 'u8[4096]{0}', space=vmem, size = 0x1000, scoped, tag = 'input window, operand 0, single buffered']
    #allocation3 [shape = 's32[1]{0}', space=sflag, size = 0x4, scoped, tag = 'scoped memory for tpu_custom_call.1']
    #allocation4 [shape = 'u8[1024]{0}', space=vmem, size = 0x400, scoped, tag = 'input window, operand 2, single buffered']
    #allocation5 [shape = 's32[1]{0}', space=sflag, size = 0x4, scoped, tag = 'scoped memory for tpu_custom_call.1']
    #allocation6 [shape = 'u8[131072]{0}', space=vmem, size = 0x20000, scoped, tag = 'input window, operand 3, single buffered']
    #allocation7 [shape = 'u8[1024]{0}', space=vmem, size = 0x400, scoped, tag = 'input window, operand 4, single buffered']
    #allocation8 [shape = 's32[1]{0}', space=sflag, size = 0x4, scoped, tag = 'scoped memory for tpu_custom_call.1']
    #allocation9 [shape = 'u8[65536]{0}', space=vmem, size = 0x10000, scoped, tag = 'input window, operand 5, single buffered']
    #allocation10 [shape = 'u8[512]{0}', space=vmem, size = 0x400, scoped, tag = 'input window, operand 6, single buffered']
    #allocation11 [shape = 's32[1]{0}', space=sflag, size = 0x4, scoped, tag = 'scoped memory for tpu_custom_call.1']
    #allocation12 [shape = 'u8[512]{0}', space=vmem, size = 0x400, scoped, tag = 'input window, operand 8, single buffered']
    %16 = vsyncpa [#allocation3], 0
    %17 = vsyncpa [#allocation5], 0
    %18 = vsyncpa [#allocation8], 0
    %19 = vsyncpa [#allocation11], 0
    // Predicated region
    $region2: #{tpu_custom_call.1} parent=1 // pred_check
      _
    $region3: #{tpu_custom_call.1} parent=1 // pred_check_branch
      %21 = sbr.rel (0) target = $region5
    $region4: #{tpu_custom_call.1} parent=1 // pred_region
      %s23 = ssub.s32 128, 128
      %24 = vsyncadd [#allocation3], %s23
      %s25 = sshll.u32 [#allocation2], 4
      %s26 = int_to_ptr.vmem [resolvable:$true] %s25
      %31 = dma.hbm_to_vmem [thread:$0]  %s0, 128, %s26, [#allocation3], 64, 64, 4
    $region5: #{tpu_custom_call.1} parent=1 // pred_fallthru
      _
    // Predicated region
    $region6: #{tpu_custom_call.1} parent=1 // pred_check
      _
    $region7: #{tpu_custom_call.1} parent=1 // pred_check_branch
      %33 = sbr.rel (0) target = $region9
    $region8: #{tpu_custom_call.1} parent=1 // pred_region
      _
    $region9: #{tpu_custom_call.1} parent=1 // pred_fallthru
      _
    // Predicated region
    $region10: #{tpu_custom_call.1} parent=1 // pred_check
      _
    $region11: #{tpu_custom_call.1} parent=1 // pred_check_branch
      %35 = sbr.rel (0) target = $region13
    $region12: #{tpu_custom_call.1} parent=1 // pred_region
      %s37 = ssub.s32 32, 32
      %38 = vsyncadd [#allocation5], %s37
      %s40 = sshll.u32 [#allocation4], 4
      %s41 = int_to_ptr.vmem [resolvable:$true] %s40
      %43 = dma.hbm_to_vmem [thread:$0]  %s2, 32, %s41, [#allocation5]
    $region13: #{tpu_custom_call.1} parent=1 // pred_fallthru
      _
    // Predicated region
    $region14: #{tpu_custom_call.1} parent=1 // pred_check
      _
    $region15: #{tpu_custom_call.1} parent=1 // pred_check_branch
      %45 = sbr.rel (0) target = $region17
    $region16: #{tpu_custom_call.1} parent=1 // pred_region
      %s47 = ssub.s32 4096, 4096
      %48 = vsyncadd [#allocation5], %s47
      %s49 = sshll.u32 [#allocation6], 4
      %s50 = int_to_ptr.vmem [resolvable:$true] %s49
      %55 = dma.hbm_to_vmem [thread:$0]  %s3, 4096, %s50, [#allocation5], 128, 128, 8
    $region17: #{tpu_custom_call.1} parent=1 // pred_fallthru
      _
    // Predicated region
    $region18: #{tpu_custom_call.1} parent=1 // pred_check
      _
    $region19: #{tpu_custom_call.1} parent=1 // pred_check_branch
      %57 = sbr.rel (0) target = $region21
    $region20: #{tpu_custom_call.1} parent=1 // pred_region
      %s59 = ssub.s32 32, 32
      %60 = vsyncadd [#allocation8], %s59
      %s62 = sshll.u32 [#allocation7], 4
      %s63 = int_to_ptr.vmem [resolvable:$true] %s62
      %65 = dma.hbm_to_vmem [thread:$0]  %s4, 32, %s63, [#allocation8]
    $region21: #{tpu_custom_call.1} parent=1 // pred_fallthru
      _
    // Predicated region
    $region22: #{tpu_custom_call.1} parent=1 // pred_check
      _
    $region23: #{tpu_custom_call.1} parent=1 // pred_check_branch
      %67 = sbr.rel (0) target = $region25
    $region24: #{tpu_custom_call.1} parent=1 // pred_region
      %s69 = ssub.s32 2048, 2048
      %70 = vsyncadd [#allocation8], %s69
      %s71 = sshll.u32 [#allocation9], 4
      %s72 = int_to_ptr.vmem [resolvable:$true] %s71
      %77 = dma.hbm_to_vmem [thread:$0]  %s5, 2048, %s72, [#allocation8], 64, 64, 4
    $region25: #{tpu_custom_call.1} parent=1 // pred_fallthru
      _
    // Predicated region
    $region26: #{tpu_custom_call.1} parent=1 // pred_check
      _
    $region27: #{tpu_custom_call.1} parent=1 // pred_check_branch
      %79 = sbr.rel (0) target = $region29
    $region28: #{tpu_custom_call.1} parent=1 // pred_region
      %s81 = ssub.s32 16, 16
      %82 = vsyncadd [#allocation11], %s81
      %s84 = sshll.u32 [#allocation10], 4
      %s85 = int_to_ptr.vmem [resolvable:$true] %s84
      %87 = dma.hbm_to_vmem [thread:$0]  %s6, 16, %s85, [#allocation11]
    $region29: #{tpu_custom_call.1} parent=1 // pred_fallthru
      _
    // Predicated region
    $region30: #{tpu_custom_call.1} parent=1 // pred_check
      _
    $region31: #{tpu_custom_call.1} parent=1 // pred_check_branch
      %89 = sbr.rel (0) target = $region33
    $region32: #{tpu_custom_call.1} parent=1 // pred_region
      _
    $region33: #{tpu_custom_call.1} parent=1 // pred_fallthru
      _
    // Predicated region
    $region34: #{tpu_custom_call.1} parent=1 // pred_check
      _
    $region35: #{tpu_custom_call.1} parent=1 // pred_check_branch
      %91 = sbr.rel (0) target = $region37
    $region36: #{tpu_custom_call.1} parent=1 // pred_region
      %s93 = ssub.s32 16, 16
      %94 = vsyncadd [#allocation11], %s93
      %s96 = sshll.u32 [#allocation12], 4
      %s97 = int_to_ptr.vmem [resolvable:$true] %s96
      %99 = dma.hbm_to_vmem [thread:$0]  %s8, 16, %s97, [#allocation11]
    $region37: #{tpu_custom_call.1} parent=1 // pred_fallthru
      _
    // Predicated region
    $region38: #{tpu_custom_call.1} parent=1 // pred_check
      _
    $region39: #{tpu_custom_call.1} parent=1 // pred_check_branch
      %101 = sbr.rel (0) target = $region41
    $region40: #{tpu_custom_call.1} parent=1 // pred_region
      _
    $region41: #{tpu_custom_call.1} parent=1 // pred_fallthru
      _
    // Predicated region
    $region42: #{tpu_custom_call.1} parent=1 // pred_check
      _
    $region43: #{tpu_custom_call.1} parent=1 // pred_check_branch
      %103 = sbr.rel (0) target = $region45
    $region44: #{tpu_custom_call.1} parent=1 // pred_region
      _
    $region45: #{tpu_custom_call.1} parent=1 // pred_fallthru
      _
    // Predicated region
    $region46: #{tpu_custom_call.1} parent=1 // pred_check
      _
    $region47: #{tpu_custom_call.1} parent=1 // pred_check_branch
      %105 = sbr.rel (0) target = $region49
    $region48: #{tpu_custom_call.1} parent=1 // pred_region
      %106 = dma.done [#allocation3], 128
    $region49: #{tpu_custom_call.1} parent=1 // pred_fallthru
      _
    // Predicated region
    $region50: #{tpu_custom_call.1} parent=1 // pred_check
      _
    $region51: #{tpu_custom_call.1} parent=1 // pred_check_branch
      %108 = sbr.rel (0) target = $region53
    $region52: #{tpu_custom_call.1} parent=1 // pred_region
      %109 = dma.done [#allocation5], 32
    $region53: #{tpu_custom_call.1} parent=1 // pred_fallthru
      _
    // Predicated region
    $region54: #{tpu_custom_call.1} parent=1 // pred_check
      _
    $region55: #{tpu_custom_call.1} parent=1 // pred_check_branch
      %111 = sbr.rel (0) target = $region57
    $region56: #{tpu_custom_call.1} parent=1 // pred_region
      %112 = dma.done [#allocation5], 4096
    $region57: #{tpu_custom_call.1} parent=1 // pred_fallthru
      _
    // Predicated region
    $region58: #{tpu_custom_call.1} parent=1 // pred_check
      _
    $region59: #{tpu_custom_call.1} parent=1 // pred_check_branch
      %114 = sbr.rel (0) target = $region61
    $region60: #{tpu_custom_call.1} parent=1 // pred_region
      %115 = dma.done [#allocation8], 32
    $region61: #{tpu_custom_call.1} parent=1 // pred_fallthru
      _
    // Predicated region
    $region62: #{tpu_custom_call.1} parent=1 // pred_check
      _
    $region63: #{tpu_custom_call.1} parent=1 // pred_check_branch
      %117 = sbr.rel (0) target = $region65
    $region64: #{tpu_custom_call.1} parent=1 // pred_region
      %118 = dma.done [#allocation8], 2048
    $region65: #{tpu_custom_call.1} parent=1 // pred_fallthru
      _
    // Predicated region
    $region66: #{tpu_custom_call.1} parent=1 // pred_check
      _
    $region67: #{tpu_custom_call.1} parent=1 // pred_check_branch
      %120 = sbr.rel (0) target = $region69
    $region68: #{tpu_custom_call.1} parent=1 // pred_region
      %121 = dma.done [#allocation11], 16
    $region69: #{tpu_custom_call.1} parent=1 // pred_fallthru
      _
    // Predicated region
    $region70: #{tpu_custom_call.1} parent=1 // pred_check
      _
    $region71: #{tpu_custom_call.1} parent=1 // pred_check_branch
      %123 = sbr.rel (0) target = $region73
    $region72: #{tpu_custom_call.1} parent=1 // pred_region
      %124 = dma.done [#allocation11], 16
    $region73: #{tpu_custom_call.1} parent=1 // pred_fallthru
      _
    %v126 = vld [vmem:[#allocation2] sm:$0xf]
    %v127 = vld [vmem:[#allocation2 + $0x4] sm:$0xf]
    %v128 = vld [vmem:[%s1] sm:$0xff]
    %v129 = vld [vmem:[%s1 + $0x8] sm:$0xff]
    %v132 = vunpack.c.l.b16 %v126
    %v133 = vunpack.c.l.b16 %v127
    %v134 = vpack.c.b16 %v133, %v132
    %v137 = vunpack.c.l.b16 %v128
    %v138 = vunpack.c.h.b16 %v128
    %v139 = vunpack.c.l.b16 %v129
    %v140 = vunpack.c.h.b16 %v129
    %v141 = vpack.c.b16 %v139, %v137
    %v142 = vpack.c.b16 %v140, %v138
    %vm145 = vcmask 130048
    %v147 = vsel %vm145, %v134, 0
    %149 = vmatprep.subr.bf16.mxu0 0
    %150 = vmatpush1.bf16.msra.mxu0 0
    %151 = vmatprep.subr.bf16.mxu0 0
    %152 = vmatpush1.bf16.msra.mxu0 0
    %153 = vmatprep.subr.bf16.mxu0 0
    %154 = vmatpush1.bf16.msra.mxu0 0
    %155 = vmatprep.subr.bf16.mxu0 0
    %156 = vmatpush1.bf16.msra.mxu0 0
    %157 = vmatprep.subr.bf16.mxu0 0
    %158 = vmatpush1.bf16.msra.mxu0 0
    %159 = vmatprep.subr.bf16.mxu0 0
    %160 = vmatpush1.bf16.msra.mxu0 0
    %161 = vmatprep.subr.bf16.mxu0 0
    %162 = vmatpush1.bf16.msra.mxu0 0
    %163 = vmatprep.subr.bf16.mxu0 %v142
    %164 = vmatpush1.bf16.msra.mxu0 %v141
    %165 = vmatprep.subr.bf16.mxu0 0
    %166 = vmatpush2.bf16.msra.mxu0 0
    %167 = vmatprep.subr.bf16.mxu0 0
    %168 = vmatpush2.bf16.msra.mxu0 0
    %169 = vmatprep.subr.bf16.mxu0 0
    %170 = vmatpush2.bf16.msra.mxu0 0
    %171 = vmatprep.subr.bf16.mxu0 0
    %172 = vmatpush2.bf16.msra.mxu0 0
    %173 = vmatprep.subr.bf16.mxu0 0
    %174 = vmatpush2.bf16.msra.mxu0 0
    %175 = vmatprep.subr.bf16.mxu0 0
    %176 = vmatpush2.bf16.msra.mxu0 0
    %177 = vmatprep.subr.bf16.mxu0 0
    %178 = vmatpush2.bf16.msra.mxu0 0
    %179 = vmatprep.subr.bf16.mxu0 0
    %180 = vmatpush2.bf16.msra.mxu0 0
    %181 = vmatprep.mubr.bf16.mxu0 0
    %182 = vmatmul.mubr.bf16.gmra.mxu0 %v147
    %v183 = vpop.f32.mrf.mxu0
    %v184 = vadd.f32 0.0, %v183
    %v185 = vpop.f32.mrf.mxu0
    %v186 = vadd.f32 0.0, %v185
    %v187 = vpop.f32.mrf.mxu0
    %v188 = vadd.f32 0.0, %v187
    %v189 = vpop.f32.mrf.mxu0
    %v190 = vadd.f32 0.0, %v189
    %191 = vdwg.mxu0
    %v192 = vpack.c.bf16 %v188, %v184
    %v193 = vpack.c.bf16 %v190, %v186
    %v194 = vld [vmem:[#allocation4] sm:$0x3]
    %v197 = vunpack.c.l.s4 1966171168
    %v198 = vunpack.c.0.s8 %v197
    %v199 = vlaneseq
    %v200 = vshrl.u32 %v199, 7
    %v201 = vsub.s32 %v198, %v200
    %v202 = vrot.slane %v194, %v201
    %v203 = vcombine.high %v202, %v202
    %v205 = vunpack.c.l.s4 1966171168
    %v206 = vunpack.c.0.s8 %v205
    %v207 = vlaneseq
    %v208 = vshrl.u32 %v207, 7
    %v209 = vsub.s32 %v206, %v208
    %v210 = vrot.slane %v202, %v209
    %v212 = vunpack.c.l.s4 1966171168
    %v213 = vunpack.c.0.s8 %v212
    %v214 = vlaneseq
    %v215 = vshrl.u32 %v214, 7
    %v216 = vsub.s32 %v213, %v215
    %v217 = vrot.slane %v203, %v216
    %v219 = vpack.i.b16 %v210, %v210
    %v221 = vlaneseq
    %v222 = vshrl.u32 %v221, 7
    %v223 = vsub.s32 0, %v222
    %v224 = vrot.slane %v219, %v223
    %v226 = vpack.i.b16 %v217, %v217
    %v228 = vlaneseq
    %v229 = vshrl.u32 %v228, 7
    %v230 = vsub.s32 0, %v229
    %v231 = vrot.slane %v226, %v230
    %v232 = vadd.bf16 %v192, %v224
    %v233 = vadd.bf16 %v193, %v231
    %v234 = vmax.bf16 %v232, 0
    %v235 = vmax.bf16 %v233, 0
    %v236 = vld [vmem:[#allocation6] sm:$0xff]
    %v237 = vld [vmem:[#allocation6 + $0x8] sm:$0xff]
    %v238 = vld [vmem:[#allocation6 + $0x10] sm:$0xff]
    %v239 = vld [vmem:[#allocation6 + $0x18] sm:$0xff]
    %v240 = vld [vmem:[#allocation6 + $0x20] sm:$0xff]
    %v241 = vld [vmem:[#allocation6 + $0x28] sm:$0xff]
    %v242 = vld [vmem:[#allocation6 + $0x30] sm:$0xff]
    %v243 = vld [vmem:[#allocation6 + $0x38] sm:$0xff]
    %v244 = vld [vmem:[#allocation6 + $0x40] sm:$0xff]
    %v245 = vld [vmem:[#allocation6 + $0x48] sm:$0xff]
    %v246 = vld [vmem:[#allocation6 + $0x50] sm:$0xff]
    %v247 = vld [vmem:[#allocation6 + $0x58] sm:$0xff]
    %v248 = vld [vmem:[#allocation6 + $0x60] sm:$0xff]
    %v249 = vld [vmem:[#allocation6 + $0x68] sm:$0xff]
    %v250 = vld [vmem:[#allocation6 + $0x70] sm:$0xff]
    %v251 = vld [vmem:[#allocation6 + $0x78] sm:$0xff]
    %v252 = vld [vmem:[#allocation6 + $0x80] sm:$0xff]
    %v253 = vld [vmem:[#allocation6 + $0x88] sm:$0xff]
    %v254 = vld [vmem:[#allocation6 + $0x90] sm:$0xff]
    %v255 = vld [vmem:[#allocation6 + $0x98] sm:$0xff]
    %v256 = vld [vmem:[#allocation6 + $0xa0] sm:$0xff]
    %v257 = vld [vmem:[#allocation6 + $0xa8] sm:$0xff]
    %v258 = vld [vmem:[#allocation6 + $0xb0] sm:$0xff]
    %v259 = vld [vmem:[#allocation6 + $0xb8] sm:$0xff]
    %v260 = vld [vmem:[#allocation6 + $0xc0] sm:$0xff]
    %v261 = vld [vmem:[#allocation6 + $0xc8] sm:$0xff]
    %v262 = vld [vmem:[#allocation6 + $0xd0] sm:$0xff]
    %v263 = vld [vmem:[#allocation6 + $0xd8] sm:$0xff]
    %v264 = vld [vmem:[#allocation6 + $0xe0] sm:$0xff]
    %v265 = vld [vmem:[#allocation6 + $0xe8] sm:$0xff]
    %v266 = vld [vmem:[#allocation6 + $0xf0] sm:$0xff]
    %v267 = vld [vmem:[#allocation6 + $0xf8] sm:$0xff]
    %v300 = vunpack.c.l.b16 %v236
    %v301 = vunpack.c.h.b16 %v236
    %v302 = vunpack.c.l.b16 %v237
    %v303 = vunpack.c.h.b16 %v237
    %v304 = vunpack.c.l.b16 %v238
    %v305 = vunpack.c.h.b16 %v238
    %v306 = vunpack.c.l.b16 %v239
    %v307 = vunpack.c.h.b16 %v239
    %v308 = vunpack.c.l.b16 %v240
    %v309 = vunpack.c.h.b16 %v240
    %v310 = vunpack.c.l.b16 %v241
    %v311 = vunpack.c.h.b16 %v241
    %v312 = vunpack.c.l.b16 %v242
    %v313 = vunpack.c.h.b16 %v242
    %v314 = vunpack.c.l.b16 %v243
    %v315 = vunpack.c.h.b16 %v243
    %v316 = vunpack.c.l.b16 %v244
    %v317 = vunpack.c.h.b16 %v244
    %v318 = vunpack.c.l.b16 %v245
    %v319 = vunpack.c.h.b16 %v245
    %v320 = vunpack.c.l.b16 %v246
    %v321 = vunpack.c.h.b16 %v246
    %v322 = vunpack.c.l.b16 %v247
    %v323 = vunpack.c.h.b16 %v247
    %v324 = vunpack.c.l.b16 %v248
    %v325 = vunpack.c.h.b16 %v248
    %v326 = vunpack.c.l.b16 %v249
    %v327 = vunpack.c.h.b16 %v249
    %v328 = vunpack.c.l.b16 %v250
    %v329 = vunpack.c.h.b16 %v250
    %v330 = vunpack.c.l.b16 %v251
    %v331 = vunpack.c.h.b16 %v251
    %v332 = vunpack.c.l.b16 %v252
    %v333 = vunpack.c.h.b16 %v252
    %v334 = vunpack.c.l.b16 %v253
    %v335 = vunpack.c.h.b16 %v253
    %v336 = vunpack.c.l.b16 %v254
    %v337 = vunpack.c.h.b16 %v254
    %v338 = vunpack.c.l.b16 %v255
    %v339 = vunpack.c.h.b16 %v255
    %v340 = vunpack.c.l.b16 %v256
    %v341 = vunpack.c.h.b16 %v256
    %v342 = vunpack.c.l.b16 %v257
    %v343 = vunpack.c.h.b16 %v257
    %v344 = vunpack.c.l.b16 %v258
    %v345 = vunpack.c.h.b16 %v258
    %v346 = vunpack.c.l.b16 %v259
    %v347 = vunpack.c.h.b16 %v259
    %v348 = vunpack.c.l.b16 %v260
    %v349 = vunpack.c.h.b16 %v260
    %v350 = vunpack.c.l.b16 %v261
    %v351 = vunpack.c.h.b16 %v261
    %v352 = vunpack.c.l.b16 %v262
    %v353 = vunpack.c.h.b16 %v262
    %v354 = vunpack.c.l.b16 %v263
    %v355 = vunpack.c.h.b16 %v263
    %v356 = vunpack.c.l.b16 %v264
    %v357 = vunpack.c.h.b16 %v264
    %v358 = vunpack.c.l.b16 %v265
    %v359 = vunpack.c.h.b16 %v265
    %v360 = vunpack.c.l.b16 %v266
    %v361 = vunpack.c.h.b16 %v266
    %v362 = vunpack.c.l.b16 %v267
    %v363 = vunpack.c.h.b16 %v267
    %v364 = vpack.c.b16 %v302, %v300
    %v365 = vpack.c.b16 %v303, %v301
    %v366 = vpack.c.b16 %v306, %v304
    %v367 = vpack.c.b16 %v307, %v305
    %v368 = vpack.c.b16 %v310, %v308
    %v369 = vpack.c.b16 %v311, %v309
    %v370 = vpack.c.b16 %v314, %v312
    %v371 = vpack.c.b16 %v315, %v313
    %v372 = vpack.c.b16 %v318, %v316
    %v373 = vpack.c.b16 %v319, %v317
    %v374 = vpack.c.b16 %v322, %v320
    %v375 = vpack.c.b16 %v323, %v321
    %v376 = vpack.c.b16 %v326, %v324
    %v377 = vpack.c.b16 %v327, %v325
    %v378 = vpack.c.b16 %v330, %v328
    %v379 = vpack.c.b16 %v331, %v329
    %v380 = vpack.c.b16 %v334, %v332
    %v381 = vpack.c.b16 %v335, %v333
    %v382 = vpack.c.b16 %v338, %v336
    %v383 = vpack.c.b16 %v339, %v337
    %v384 = vpack.c.b16 %v342, %v340
    %v385 = vpack.c.b16 %v343, %v341
    %v386 = vpack.c.b16 %v346, %v344
    %v387 = vpack.c.b16 %v347, %v345
    %v388 = vpack.c.b16 %v350, %v348
    %v389 = vpack.c.b16 %v351, %v349
    %v390 = vpack.c.b16 %v354, %v352
    %v391 = vpack.c.b16 %v355, %v353
    %v392 = vpack.c.b16 %v358, %v356
    %v393 = vpack.c.b16 %v359, %v357
    %v394 = vpack.c.b16 %v362, %v360
    %v395 = vpack.c.b16 %v363, %v361
    %428 = vmatprep.subr.bf16.mxu0 %v379
    %429 = vmatpush1.bf16.msra.mxu0 %v378
    %430 = vmatprep.subr.bf16.mxu0 %v377
    %431 = vmatpush1.bf16.msra.mxu0 %v376
    %432 = vmatprep.subr.bf16.mxu0 %v375
    %433 = vmatpush1.bf16.msra.mxu0 %v374
    %434 = vmatprep.subr.bf16.mxu0 %v373
    %435 = vmatpush1.bf16.msra.mxu0 %v372
    %436 = vmatprep.subr.bf16.mxu0 %v371
    %437 = vmatpush1.bf16.msra.mxu0 %v370
    %438 = vmatprep.subr.bf16.mxu0 %v369
    %439 = vmatpush1.bf16.msra.mxu0 %v368
    %440 = vmatprep.subr.bf16.mxu0 %v367
    %441 = vmatpush1.bf16.msra.mxu0 %v366
    %442 = vmatprep.subr.bf16.mxu0 %v365
    %443 = vmatpush1.bf16.msra.mxu0 %v364
    %444 = vmatprep.subr.bf16.mxu0 %v395
    %445 = vmatpush2.bf16.msra.mxu0 %v394
    %446 = vmatprep.subr.bf16.mxu0 %v393
    %447 = vmatpush2.bf16.msra.mxu0 %v392
    %448 = vmatprep.subr.bf16.mxu0 %v391
    %449 = vmatpush2.bf16.msra.mxu0 %v390
    %450 = vmatprep.subr.bf16.mxu0 %v389
    %451 = vmatpush2.bf16.msra.mxu0 %v388
    %452 = vmatprep.subr.bf16.mxu0 %v387
    %453 = vmatpush2.bf16.msra.mxu0 %v386
    %454 = vmatprep.subr.bf16.mxu0 %v385
    %455 = vmatpush2.bf16.msra.mxu0 %v384
    %456 = vmatprep.subr.bf16.mxu0 %v383
    %457 = vmatpush2.bf16.msra.mxu0 %v382
    %458 = vmatprep.subr.bf16.mxu0 %v381
    %459 = vmatpush2.bf16.msra.mxu0 %v380
    %460 = vmatprep.mubr.bf16.mxu0 %v235
    %461 = vmatmul.mubr.bf16.gmra.mxu0 %v234
    %v462 = vpop.f32.mrf.mxu0
    %v463 = vadd.f32 0.0, %v462
    %v464 = vpop.f32.mrf.mxu0
    %v465 = vadd.f32 0.0, %v464
    %v466 = vpop.f32.mrf.mxu0
    %v467 = vadd.f32 0.0, %v466
    %v468 = vpop.f32.mrf.mxu0
    %v469 = vadd.f32 0.0, %v468
    %470 = vdwg.mxu0
    %v471 = vpack.c.bf16 %v467, %v463
    %v472 = vpack.c.bf16 %v469, %v465
    %v473 = vld [vmem:[#allocation7] sm:$0x3]
    %v476 = vunpack.c.l.s4 1966171168
    %v477 = vunpack.c.0.s8 %v476
    %v478 = vlaneseq
    %v479 = vshrl.u32 %v478, 7
    %v480 = vsub.s32 %v477, %v479
    %v481 = vrot.slane %v473, %v480
    %v482 = vcombine.high %v481, %v481
    %v484 = vunpack.c.l.s4 1966171168
    %v485 = vunpack.c.0.s8 %v484
    %v486 = vlaneseq
    %v487 = vshrl.u32 %v486, 7
    %v488 = vsub.s32 %v485, %v487
    %v489 = vrot.slane %v481, %v488
    %v491 = vunpack.c.l.s4 1966171168
    %v492 = vunpack.c.0.s8 %v491
    %v493 = vlaneseq
    %v494 = vshrl.u32 %v493, 7
    %v495 = vsub.s32 %v492, %v494
    %v496 = vrot.slane %v482, %v495
    %v498 = vpack.i.b16 %v489, %v489
    %v500 = vlaneseq
    %v501 = vshrl.u32 %v500, 7
    %v502 = vsub.s32 0, %v501
    %v503 = vrot.slane %v498, %v502
    %v505 = vpack.i.b16 %v496, %v496
    %v507 = vlaneseq
    %v508 = vshrl.u32 %v507, 7
    %v509 = vsub.s32 0, %v508
    %v510 = vrot.slane %v505, %v509
    %v511 = vadd.bf16 %v471, %v503
    %v512 = vadd.bf16 %v472, %v510
    %v513 = vmax.bf16 %v511, 0
    %v514 = vmax.bf16 %v512, 0
    %v515 = vld [vmem:[#allocation9] sm:$0xf]
    %v516 = vld [vmem:[#allocation9 + $0x4] sm:$0xf]
    %v517 = vld [vmem:[#allocation9 + $0x8] sm:$0xf]
    %v518 = vld [vmem:[#allocation9 + $0xc] sm:$0xf]
    %v519 = vld [vmem:[#allocation9 + $0x10] sm:$0xf]
    %v520 = vld [vmem:[#allocation9 + $0x14] sm:$0xf]
    %v521 = vld [vmem:[#allocation9 + $0x18] sm:$0xf]
    %v522 = vld [vmem:[#allocation9 + $0x1c] sm:$0xf]
    %v523 = vld [vmem:[#allocation9 + $0x20] sm:$0xf]
    %v524 = vld [vmem:[#allocation9 + $0x24] sm:$0xf]
    %v525 = vld [vmem:[#allocation9 + $0x28] sm:$0xf]
    %v526 = vld [vmem:[#allocation9 + $0x2c] sm:$0xf]
    %v527 = vld [vmem:[#allocation9 + $0x30] sm:$0xf]
    %v528 = vld [vmem:[#allocation9 + $0x34] sm:$0xf]
    %v529 = vld [vmem:[#allocation9 + $0x38] sm:$0xf]
    %v530 = vld [vmem:[#allocation9 + $0x3c] sm:$0xf]
    %v531 = vld [vmem:[#allocation9 + $0x40] sm:$0xf]
    %v532 = vld [vmem:[#allocation9 + $0x44] sm:$0xf]
    %v533 = vld [vmem:[#allocation9 + $0x48] sm:$0xf]
    %v534 = vld [vmem:[#allocation9 + $0x4c] sm:$0xf]
    %v535 = vld [vmem:[#allocation9 + $0x50] sm:$0xf]
    %v536 = vld [vmem:[#allocation9 + $0x54] sm:$0xf]
    %v537 = vld [vmem:[#allocation9 + $0x58] sm:$0xf]
    %v538 = vld [vmem:[#allocation9 + $0x5c] sm:$0xf]
    %v539 = vld [vmem:[#allocation9 + $0x60] sm:$0xf]
    %v540 = vld [vmem:[#allocation9 + $0x64] sm:$0xf]
    %v541 = vld [vmem:[#allocation9 + $0x68] sm:$0xf]
    %v542 = vld [vmem:[#allocation9 + $0x6c] sm:$0xf]
    %v543 = vld [vmem:[#allocation9 + $0x70] sm:$0xf]
    %v544 = vld [vmem:[#allocation9 + $0x74] sm:$0xf]
    %v545 = vld [vmem:[#allocation9 + $0x78] sm:$0xf]
    %v546 = vld [vmem:[#allocation9 + $0x7c] sm:$0xf]
    %v579 = vunpack.c.l.b16 %v515
    %v580 = vunpack.c.l.b16 %v516
    %v581 = vunpack.c.l.b16 %v517
    %v582 = vunpack.c.l.b16 %v518
    %v583 = vunpack.c.l.b16 %v519
    %v584 = vunpack.c.l.b16 %v520
    %v585 = vunpack.c.l.b16 %v521
    %v586 = vunpack.c.l.b16 %v522
    %v587 = vunpack.c.l.b16 %v523
    %v588 = vunpack.c.l.b16 %v524
    %v589 = vunpack.c.l.b16 %v525
    %v590 = vunpack.c.l.b16 %v526
    %v591 = vunpack.c.l.b16 %v527
    %v592 = vunpack.c.l.b16 %v528
    %v593 = vunpack.c.l.b16 %v529
    %v594 = vunpack.c.l.b16 %v530
    %v595 = vunpack.c.l.b16 %v531
    %v596 = vunpack.c.l.b16 %v532
    %v597 = vunpack.c.l.b16 %v533
    %v598 = vunpack.c.l.b16 %v534
    %v599 = vunpack.c.l.b16 %v535
    %v600 = vunpack.c.l.b16 %v536
    %v601 = vunpack.c.l.b16 %v537
    %v602 = vunpack.c.l.b16 %v538
    %v603 = vunpack.c.l.b16 %v539
    %v604 = vunpack.c.l.b16 %v540
    %v605 = vunpack.c.l.b16 %v541
    %v606 = vunpack.c.l.b16 %v542
    %v607 = vunpack.c.l.b16 %v543
    %v608 = vunpack.c.l.b16 %v544
    %v609 = vunpack.c.l.b16 %v545
    %v610 = vunpack.c.l.b16 %v546
    %v611 = vpack.c.b16 %v580, %v579
    %v612 = vpack.c.b16 %v582, %v581
    %v613 = vpack.c.b16 %v584, %v583
    %v614 = vpack.c.b16 %v586, %v585
    %v615 = vpack.c.b16 %v588, %v587
    %v616 = vpack.c.b16 %v590, %v589
    %v617 = vpack.c.b16 %v592, %v591
    %v618 = vpack.c.b16 %v594, %v593
    %v619 = vpack.c.b16 %v596, %v595
    %v620 = vpack.c.b16 %v598, %v597
    %v621 = vpack.c.b16 %v600, %v599
    %v622 = vpack.c.b16 %v602, %v601
    %v623 = vpack.c.b16 %v604, %v603
    %v624 = vpack.c.b16 %v606, %v605
    %v625 = vpack.c.b16 %v608, %v607
    %v626 = vpack.c.b16 %v610, %v609
    %643 = vmatprep.subr.bf16.mxu0 0
    %644 = vmatpush1.bf16.msra.mxu0 %v618
    %645 = vmatprep.subr.bf16.mxu0 0
    %646 = vmatpush1.bf16.msra.mxu0 %v617
    %647 = vmatprep.subr.bf16.mxu0 0
    %648 = vmatpush1.bf16.msra.mxu0 %v616
    %649 = vmatprep.subr.bf16.mxu0 0
    %650 = vmatpush1.bf16.msra.mxu0 %v615
    %651 = vmatprep.subr.bf16.mxu0 0
    %652 = vmatpush1.bf16.msra.mxu0 %v614
    %653 = vmatprep.subr.bf16.mxu0 0
    %654 = vmatpush1.bf16.msra.mxu0 %v613
    %655 = vmatprep.subr.bf16.mxu0 0
    %656 = vmatpush1.bf16.msra.mxu0 %v612
    %657 = vmatprep.subr.bf16.mxu0 0
    %658 = vmatpush1.bf16.msra.mxu0 %v611
    %659 = vmatprep.subr.bf16.mxu0 0
    %660 = vmatpush2.bf16.msra.mxu0 %v626
    %661 = vmatprep.subr.bf16.mxu0 0
    %662 = vmatpush2.bf16.msra.mxu0 %v625
    %663 = vmatprep.subr.bf16.mxu0 0
    %664 = vmatpush2.bf16.msra.mxu0 %v624
    %665 = vmatprep.subr.bf16.mxu0 0
    %666 = vmatpush2.bf16.msra.mxu0 %v623
    %667 = vmatprep.subr.bf16.mxu0 0
    %668 = vmatpush2.bf16.msra.mxu0 %v622
    %669 = vmatprep.subr.bf16.mxu0 0
    %670 = vmatpush2.bf16.msra.mxu0 %v621
    %671 = vmatprep.subr.bf16.mxu0 0
    %672 = vmatpush2.bf16.msra.mxu0 %v620
    %673 = vmatprep.subr.bf16.mxu0 0
    %674 = vmatpush2.bf16.msra.mxu0 %v619
    %675 = vmatprep.mubr.bf16.mxu0 %v514
    %676 = vmatmul.mubr.bf16.gmra.mxu0 %v513
    %v677 = vpop.f32.mrf.mxu0
    %v678 = vadd.f32 0.0, %v677
    %v679 = vpop.f32.mrf.mxu0
    %v680 = vpop.f32.mrf.mxu0
    %v681 = vadd.f32 0.0, %v680
    %v682 = vpop.f32.mrf.mxu0
    %683 = vdwg.mxu0
    %v684 = vpack.c.bf16 %v681, %v678
    %v685 = vld [vmem:[#allocation10] sm:$0x1]
    %v687 = vpack.i.b16 %v685, %v685
    %v689 = vlaneseq
    %v690 = vshrl.u32 %v689, 7
    %v691 = vsub.s32 0, %v690
    %v692 = vrot.slane %v687, %v691
    %v693 = vadd.bf16 %v684, %v692
    %v694 = vmax.bf16 %v693, 0
    %v695 = vld [vmem:[%s7] sm:$0xf]
    %v696 = vld [vmem:[%s7 + $0x4] sm:$0xf]
    %v697 = vld [vmem:[%s7 + $0x8] sm:$0xf]
    %v698 = vld [vmem:[%s7 + $0xc] sm:$0xf]
    %v699 = vld [vmem:[%s7 + $0x10] sm:$0xf]
    %v700 = vld [vmem:[%s7 + $0x14] sm:$0xf]
    %v701 = vld [vmem:[%s7 + $0x18] sm:$0xf]
    %v702 = vld [vmem:[%s7 + $0x1c] sm:$0xf]
    %v703 = vld [vmem:[%s7 + $0x20] sm:$0xf]
    %v704 = vld [vmem:[%s7 + $0x24] sm:$0xf]
    %v705 = vld [vmem:[%s7 + $0x28] sm:$0xf]
    %v706 = vld [vmem:[%s7 + $0x2c] sm:$0xf]
    %v707 = vld [vmem:[%s7 + $0x30] sm:$0xf]
    %v708 = vld [vmem:[%s7 + $0x34] sm:$0xf]
    %v709 = vld [vmem:[%s7 + $0x38] sm:$0xf]
    %v710 = vld [vmem:[%s7 + $0x3c] sm:$0xf]
    %v727 = vunpack.c.l.b16 %v695
    %v728 = vunpack.c.l.b16 %v696
    %v729 = vunpack.c.l.b16 %v697
    %v730 = vunpack.c.l.b16 %v698
    %v731 = vunpack.c.l.b16 %v699
    %v732 = vunpack.c.l.b16 %v700
    %v733 = vunpack.c.l.b16 %v701
    %v734 = vunpack.c.l.b16 %v702
    %v735 = vunpack.c.l.b16 %v703
    %v736 = vunpack.c.l.b16 %v704
    %v737 = vunpack.c.l.b16 %v705
    %v738 = vunpack.c.l.b16 %v706
    %v739 = vunpack.c.l.b16 %v707
    %v740 = vunpack.c.l.b16 %v708
    %v741 = vunpack.c.l.b16 %v709
    %v742 = vunpack.c.l.b16 %v710
    %v743 = vpack.c.b16 %v728, %v727
    %v744 = vpack.c.b16 %v730, %v729
    %v745 = vpack.c.b16 %v732, %v731
    %v746 = vpack.c.b16 %v734, %v733
    %v747 = vpack.c.b16 %v736, %v735
    %v748 = vpack.c.b16 %v738, %v737
    %v749 = vpack.c.b16 %v740, %v739
    %v750 = vpack.c.b16 %v742, %v741
    %759 = vmatprep.subr.bf16.mxu0 0
    %760 = vmatpush1.bf16.msra.mxu0 %v750
    %761 = vmatprep.subr.bf16.mxu0 0
    %762 = vmatpush1.bf16.msra.mxu0 %v749
    %763 = vmatprep.subr.bf16.mxu0 0
    %764 = vmatpush1.bf16.msra.mxu0 %v748
    %765 = vmatprep.subr.bf16.mxu0 0
    %766 = vmatpush1.bf16.msra.mxu0 %v747
    %767 = vmatprep.subr.bf16.mxu0 0
    %768 = vmatpush1.bf16.msra.mxu0 %v746
    %769 = vmatprep.subr.bf16.mxu0 0
    %770 = vmatpush1.bf16.msra.mxu0 %v745
    %771 = vmatprep.subr.bf16.mxu0 0
    %772 = vmatpush1.bf16.msra.mxu0 %v744
    %773 = vmatprep.subr.bf16.mxu0 0
    %774 = vmatpush1.bf16.msra.mxu0 %v743
    %775 = vmatprep.subr.bf16.mxu0 0
    %776 = vmatpush2.bf16.msra.mxu0 0
    %777 = vmatprep.subr.bf16.mxu0 0
    %778 = vmatpush2.bf16.msra.mxu0 0
    %779 = vmatprep.subr.bf16.mxu0 0
    %780 = vmatpush2.bf16.msra.mxu0 0
    %781 = vmatprep.subr.bf16.mxu0 0
    %782 = vmatpush2.bf16.msra.mxu0 0
    %783 = vmatprep.subr.bf16.mxu0 0
    %784 = vmatpush2.bf16.msra.mxu0 0
    %785 = vmatprep.subr.bf16.mxu0 0
    %786 = vmatpush2.bf16.msra.mxu0 0
    %787 = vmatprep.subr.bf16.mxu0 0
    %788 = vmatpush2.bf16.msra.mxu0 0
    %789 = vmatprep.subr.bf16.mxu0 0
    %790 = vmatpush2.bf16.msra.mxu0 0
    %791 = vmatprep.mubr.bf16.mxu0 0
    %792 = vmatmul.mubr.bf16.gmra.mxu0 %v694
    %v793 = vpop.f32.mrf.mxu0
    %v794 = vadd.f32 0.0, %v793
    %v795 = vpop.f32.mrf.mxu0
    %v796 = vpop.f32.mrf.mxu0
    %v797 = vadd.f32 0.0, %v796
    %v798 = vpop.f32.mrf.mxu0
    %799 = vdwg.mxu0
    %v800 = vpack.c.bf16 %v797, %v794
    %v801 = vld [vmem:[#allocation12] sm:$0x1]
    %v803 = vpack.i.b16 %v801, %v801
    %v805 = vlaneseq
    %v806 = vshrl.u32 %v805, 7
    %v807 = vsub.s32 0, %v806
    %v808 = vrot.slane %v803, %v807
    %v809 = vadd.bf16 %v800, %v808
    %v810 = vmax.bf16 %v809, 0
    %v811 = vld [vmem:[%s9] sm:$0xf]
    %v812 = vld [vmem:[%s9 + $0x4] sm:$0xf]
    %v813 = vld [vmem:[%s9 + $0x8] sm:$0xf]
    %v814 = vld [vmem:[%s9 + $0xc] sm:$0xf]
    %v815 = vld [vmem:[%s9 + $0x10] sm:$0xf]
    %v816 = vld [vmem:[%s9 + $0x14] sm:$0xf]
    %v817 = vld [vmem:[%s9 + $0x18] sm:$0xf]
    %v818 = vld [vmem:[%s9 + $0x1c] sm:$0xf]
    %v819 = vld [vmem:[%s9 + $0x20] sm:$0xf]
    %v820 = vld [vmem:[%s9 + $0x24] sm:$0xf]
    %v821 = vld [vmem:[%s9 + $0x28] sm:$0xf]
    %v822 = vld [vmem:[%s9 + $0x2c] sm:$0xf]
    %v823 = vld [vmem:[%s9 + $0x30] sm:$0xf]
    %v824 = vld [vmem:[%s9 + $0x34] sm:$0xf]
    %v825 = vld [vmem:[%s9 + $0x38] sm:$0xf]
    %v826 = vld [vmem:[%s9 + $0x3c] sm:$0xf]
    %v827 = vld [vmem:[%s10] sm:$0x1]
    %v829 = vlaneseq
    %v830 = vshrl.u32 %v829, 7
    %v831 = vsub.s32 0, %v830
    %v832 = vrot.slane %v827, %v831
    %v850 = vunpack.c.l.b16 %v811
    %v851 = vunpack.c.l.b16 %v812
    %v852 = vunpack.c.l.b16 %v813
    %v853 = vunpack.c.l.b16 %v814
    %v854 = vunpack.c.l.b16 %v815
    %v855 = vunpack.c.l.b16 %v816
    %v856 = vunpack.c.l.b16 %v817
    %v857 = vunpack.c.l.b16 %v818
    %v858 = vunpack.c.l.b16 %v819
    %v859 = vunpack.c.l.b16 %v820
    %v860 = vunpack.c.l.b16 %v821
    %v861 = vunpack.c.l.b16 %v822
    %v862 = vunpack.c.l.b16 %v823
    %v863 = vunpack.c.l.b16 %v824
    %v864 = vunpack.c.l.b16 %v825
    %v865 = vunpack.c.l.b16 %v826
    %v866 = vpack.c.b16 %v851, %v850
    %v867 = vpack.c.b16 %v853, %v852
    %v868 = vpack.c.b16 %v855, %v854
    %v869 = vpack.c.b16 %v857, %v856
    %v870 = vpack.c.b16 %v859, %v858
    %v871 = vpack.c.b16 %v861, %v860
    %v872 = vpack.c.b16 %v863, %v862
    %v873 = vpack.c.b16 %v865, %v864
    %882 = vmatprep.subr.bf16.mxu0 0
    %883 = vmatpush1.bf16.msra.mxu0 %v873
    %884 = vmatprep.subr.bf16.mxu0 0
    %885 = vmatpush1.bf16.msra.mxu0 %v872
    %886 = vmatprep.subr.bf16.mxu0 0
    %887 = vmatpush1.bf16.msra.mxu0 %v871
    %888 = vmatprep.subr.bf16.mxu0 0
    %889 = vmatpush1.bf16.msra.mxu0 %v870
    %890 = vmatprep.subr.bf16.mxu0 0
    %891 = vmatpush1.bf16.msra.mxu0 %v869
    %892 = vmatprep.subr.bf16.mxu0 0
    %893 = vmatpush1.bf16.msra.mxu0 %v868
    %894 = vmatprep.subr.bf16.mxu0 0
    %895 = vmatpush1.bf16.msra.mxu0 %v867
    %896 = vmatprep.subr.bf16.mxu0 0
    %897 = vmatpush1.bf16.msra.mxu0 %v866
    %898 = vmatprep.subr.bf16.mxu0 0
    %899 = vmatpush2.bf16.msra.mxu0 0
    %900 = vmatprep.subr.bf16.mxu0 0
    %901 = vmatpush2.bf16.msra.mxu0 0
    %902 = vmatprep.subr.bf16.mxu0 0
    %903 = vmatpush2.bf16.msra.mxu0 0
    %904 = vmatprep.subr.bf16.mxu0 0
    %905 = vmatpush2.bf16.msra.mxu0 0
    %906 = vmatprep.subr.bf16.mxu0 0
    %907 = vmatpush2.bf16.msra.mxu0 0
    %908 = vmatprep.subr.bf16.mxu0 0
    %909 = vmatpush2.bf16.msra.mxu0 0
    %910 = vmatprep.subr.bf16.mxu0 0
    %911 = vmatpush2.bf16.msra.mxu0 0
    %912 = vmatprep.subr.bf16.mxu0 0
    %913 = vmatpush2.bf16.msra.mxu0 0
    %914 = vmatprep.mubr.bf16.mxu0 0
    %915 = vmatmul.mubr.bf16.gmra.mxu0 %v810
    %v916 = vpop.f32.mrf.mxu0
    %v917 = vadd.f32 %v832, %v916
    %v918 = vpop.f32.mrf.mxu0
    %v919 = vpop.f32.mrf.mxu0
    %v920 = vadd.f32 %v832, %v919
    %v921 = vpop.f32.mrf.mxu0
    %922 = vdwg.mxu0
    %vm923 = vcmask 64512
    %924 = vst.msk [vmem:[%s11] sm:$0xff] %vm923, %v917
    %925 = vst.msk [vmem:[%s11 + $0x8] sm:$0xff] %vm923, %v920
    // Predicated region
    $region74: #{tpu_custom_call.1} parent=1 // pred_check
      _
    $region75: #{tpu_custom_call.1} parent=1 // pred_check_branch
      %927 = sbr.rel (0) target = $region77
    $region76: #{tpu_custom_call.1} parent=1 // pred_region
      _
    $region77: #{tpu_custom_call.1} parent=1 // pred_fallthru
      _
    // Predicated region
    $region78: #{tpu_custom_call.1} parent=1 // pred_check
      _
    $region79: #{tpu_custom_call.1} parent=1 // pred_check_branch
      %929 = sbr.rel (0) target = $region81
    $region80: #{tpu_custom_call.1} parent=1 // pred_region
      _
    $region81: #{tpu_custom_call.1} parent=1 // pred_fallthru
      _
    %930 = vsyncpa [#allocation3], 1
    %931 = vsyncpa [#allocation5], 1
    %932 = vsyncpa [#allocation8], 1
    %933 = vsyncpa [#allocation11], 1

</llo_original>
